<compile_context>
chip_gen: v6e
topology: v6e:2x2x1
jax: 0.10.0
libtpu: 0.0.40
codegen_flags: <defaults>
</compile_context>

<pallas_src>
import jax
import jax.numpy as jnp
from jax import lax
from jax.experimental import pallas as pl
from jax.experimental.pallas import tpu as pltpu

EPS = 1e-5


def _fused_proj_kernel(x_ref, w1_ref, g1_ref, b1_ref, w3_ref, o_ref):
    """One grid step = one hidden-feature tile of layer1, folded into layer3's contraction."""
    k = pl.program_id(1)                      # hidden-tile (reduction) index
    inv_n = 1.0 / o_ref.shape[0]              # static batch size

    @pl.when(k == 0)
    def _init():
        o_ref[...] = jnp.zeros_like(o_ref)

    # ---- layer1 tile: h = x @ W1[:, tile]  (bf16 MXU inputs, f32 accumulation) ----
    h = jnp.dot(
        x_ref[...].astype(jnp.bfloat16),
        w1_ref[...].astype(jnp.bfloat16),
        preferred_element_type=jnp.float32,
    )                                                     # [N, th] f32

    # ---- BN1 (train mode, exact per-feature stats over the resident batch) + ReLU ----
    # Two-pass variance: center first, then square (no catastrophic cancellation).
    mean = jnp.sum(h, axis=0, keepdims=True) * inv_n
    c = h - mean
    var = jnp.sum(c * c, axis=0, keepdims=True) * inv_n
    y = c * (g1_ref[...] * lax.rsqrt(var + EPS)) + b1_ref[...]
    y = jnp.maximum(y, 0.0)

    # ---- layer3 partial contraction, accumulated straight into the resident output ----
    o_ref[...] += jnp.dot(
        y.astype(jnp.bfloat16),
        w3_ref[...].astype(jnp.bfloat16),
        preferred_element_type=jnp.float32,
    )

    @pl.when(k == pl.num_programs(1) - 1)
    def _finalize():
        h2 = o_ref[...]
        m2 = jnp.sum(h2, axis=0, keepdims=True) * inv_n
        c2 = h2 - m2
        v2 = jnp.sum(c2 * c2, axis=0, keepdims=True) * inv_n
        o_ref[...] = c2 * lax.rsqrt(v2 + EPS)             # BatchNorm1d(affine=False)


def _pick_tile(dim):
    for t in (256, 128):
        if dim % t == 0:
            return t
    return dim


def projection_mlp(x, w1, g1, beta1, w3):
    """Fused num_layers=2 path: ReLU(BN1(x @ W1)) @ W3 -> BN2 (affine=False).

    Linear biases are intentionally omitted (exactly cancelled by the following BN
    mean subtraction). The batch axis stays fully resident so BN statistics are exact.
    """
    N, K = x.shape
    Kw, H = w1.shape
    Hw, F = w3.shape
    assert K == Kw and H == Hw
    assert N % 8 == 0, "batch must be a sublane multiple (8) for this kernel"

    th = _pick_tile(H)      # hidden (reduction) tile
    tf = _pick_tile(F)      # output-feature tile (parallel axis; >=2 tiles feeds both v7x TCs)
    n_h, n_f = H // th, F // tf
    grid = (n_f, n_h)

    # VMEM budget from actual (double-buffered) block sizes, clamped to v7x's 64 MiB.
    vmem_bytes = (
        2 * N * K * 4           # x (constant block; counted 2x for safety)
        + 2 * K * th * 4        # W1 tile
        + 2 * 2 * th * 4        # gamma / beta tiles
        + 2 * th * tf * 4       # W3 tile
        + 2 * N * tf * 4        # resident output block
    )
    vmem_limit = min(max(2 * vmem_bytes + (8 << 20), 16 << 20), 64 << 20)

    flops = 2 * N * K * H * n_f + 2 * N * H * F
    bytes_accessed = N * K * 4 + K * H * 4 * n_f + 2 * H * 4 + H * F * 4 + N * F * 4

    return pl.pallas_call(
        _fused_proj_kernel,
        out_shape=jax.ShapeDtypeStruct((N, F), jnp.float32),
        grid_spec=pltpu.PrefetchScalarGridSpec(
            num_scalar_prefetch=0,
            grid=grid,
            in_specs=[
                pl.BlockSpec((N, K), lambda j, k: (0, 0)),    # x: fully resident, one DMA
                pl.BlockSpec((K, th), lambda j, k: (0, k)),   # W1 hidden-tile
                pl.BlockSpec((1, th), lambda j, k: (0, k)),   # BN1 gamma
                pl.BlockSpec((1, th), lambda j, k: (0, k)),   # BN1 beta
                pl.BlockSpec((th, tf), lambda j, k: (k, j)),  # W3 (hidden, out)-tile
            ],
            out_specs=pl.BlockSpec((N, tf), lambda j, k: (0, j)),
        ),
        compiler_params=pltpu.CompilerParams(
            dimension_semantics=("parallel", "arbitrary"),
            vmem_limit_bytes=vmem_limit,
        ),
        cost_estimate=pl.CostEstimate(
            flops=flops, transcendentals=H * n_f + F, bytes_accessed=bytes_accessed
        ),
    )(x, w1, g1.reshape(1, H), beta1.reshape(1, H), w3)


if __name__ == "__main__":
    # Small, tile-aligned demo shapes: 2 hidden tiles (exercises the fused accumulation),
    # batch a multiple of 8, feature dims multiples of 128 (lane-dense stores).
    N, in_dim, hidden_dim, out_dim = 64, 128, 512, 256

    key = jax.random.PRNGKey(0)
    kx, kw1, kb1, kw3, kb3, kg1, kbt1 = jax.random.split(key, 7)

    x = jax.random.normal(kx, (N, in_dim), dtype=jnp.float32)

    bound1 = 1.0 / (in_dim ** 0.5)
    w1 = jax.random.uniform(kw1, (in_dim, hidden_dim), jnp.float32, -bound1, bound1)
    b1 = jax.random.uniform(kb1, (1, hidden_dim), jnp.float32, -bound1, bound1)

    bound3 = 1.0 / (hidden_dim ** 0.5)
    w3 = jax.random.uniform(kw3, (hidden_dim, out_dim), jnp.float32, -bound3, bound3)
    b3 = jax.random.uniform(kb3, (1, out_dim), jnp.float32, -bound3, bound3)

    # Non-trivial BN1 affine params (PyTorch inits gamma=1, beta=0; use trained-like values
    # to actually exercise the affine path).
    g1 = 1.0 + 0.1 * jax.random.normal(kg1, (1, hidden_dim), jnp.float32)
    beta1 = 0.1 * jax.random.normal(kbt1, (1, hidden_dim), jnp.float32)

    out = projection_mlp(x, w1, g1, beta1, w3)
    jax.block_until_ready(out)

    # Reference with full PyTorch semantics INCLUDING the Linear biases (which the kernel
    # drops because BN mean subtraction cancels them exactly). Matmuls use the same
    # bf16-input / f32-accumulate policy as the kernel; against true fp32 PyTorch the
    # difference would be at the ~1e-2 relative level (acceptable for SimSiam).
    def bn_train(h, gamma=None, beta=None, eps=EPS):
        m = h.mean(0, keepdims=True)
        c = h - m
        v = (c * c).mean(0, keepdims=True)
        y = c * lax.rsqrt(v + eps)
        if gamma is not None:
            y = y * gamma + beta
        return y

    h_ref = jnp.dot(x.astype(jnp.bfloat16), w1.astype(jnp.bfloat16),
                    preferred_element_type=jnp.float32) + b1
    h_ref = jnp.maximum(bn_train(h_ref, g1, beta1), 0.0)
    y_ref = jnp.dot(h_ref.astype(jnp.bfloat16), w3.astype(jnp.bfloat16),
                    preferred_element_type=jnp.float32) + b3
    y_ref = bn_train(y_ref)

    assert out.shape == (N, out_dim)
    assert jnp.allclose(out, y_ref, atol=2e-3, rtol=2e-3), "mismatch vs reference"
    print("KERNEL_OK")
</pallas_src>

<mosaic_0001>
module attributes {stable_mosaic.version = 11 : i64} {
  func.func @_fused_proj_kernel(%arg0: i32, %arg1: i32, %arg2: memref<64x128xf32, #tpu.memory_space<vmem>>, %arg3: memref<128x256xf32, #tpu.memory_space<vmem>>, %arg4: memref<1x256xf32, #tpu.memory_space<vmem>>, %arg5: memref<1x256xf32, #tpu.memory_space<vmem>>, %arg6: memref<256x256xf32, #tpu.memory_space<vmem>>, %arg7: memref<64x256xf32, #tpu.memory_space<vmem>>) attributes {dimension_semantics = [#tpu.dimension_semantics<parallel>, #tpu.dimension_semantics<arbitrary>], iteration_bounds = array<i64: 1, 2>, scalar_prefetch = 0 : i64, scratch_operands = 0 : i64, tpu.core_type = #tpu.core_type<tc>, window_params = [{pipeline_mode = #tpu.pipeline_mode<synchronous>, transform_indices = @transform_0, window_bounds = array<i64: 64, 128>}, {transform_indices = @transform_1, window_bounds = array<i64: 128, 256>}, {transform_indices = @transform_2, window_bounds = array<i64: 1, 256>}, {transform_indices = @transform_3, window_bounds = array<i64: 1, 256>}, {transform_indices = @transform_4, window_bounds = array<i64: 256, 256>}, {transform_indices = @transform_5, window_bounds = array<i64: 64, 256>}]} {
    %c0_i32 = arith.constant 0 : i32
    %0 = arith.cmpi eq, %arg1, %c0_i32 : i32
    %1 = arith.extui %0 : i1 to i32
    %c0_i32_0 = arith.constant 0 : i32
    %2 = arith.cmpi ne, %1, %c0_i32_0 : i32
    scf.if %2 {
      %cst_22 = arith.constant 0.000000e+00 : f32
      %41 = vector.broadcast %cst_22 : f32 to vector<64x256xf32>
      %c0_23 = arith.constant 0 : index
      %c0_24 = arith.constant 0 : index
      %42 = vector.load %arg7[%c0_23, %c0_24] : memref<64x256xf32, #tpu.memory_space<vmem>>, vector<64x256xf32>
      tpu.vector_store %arg7[%c0_23, %c0_24], %41 {strides = array<i32>} : memref<64x256xf32, #tpu.memory_space<vmem>>, vector<64x256xf32>,
    } else {
    }
    %c0 = arith.constant 0 : index
    %c0_1 = arith.constant 0 : index
    %3 = vector.load %arg2[%c0, %c0_1] : memref<64x128xf32, #tpu.memory_space<vmem>>, vector<64x128xf32>
    %4 = arith.truncf %3 : vector<64x128xf32> to vector<64x128xbf16>
    %c0_2 = arith.constant 0 : index
    %c0_3 = arith.constant 0 : index
    %5 = vector.load %arg3[%c0_2, %c0_3] : memref<128x256xf32, #tpu.memory_space<vmem>>, vector<128x256xf32>
    %6 = arith.truncf %5 : vector<128x256xf32> to vector<128x256xbf16>
    %cst = arith.constant dense<0.000000e+00> : vector<64x256xf32>
    %7 = tpu.matmul %4, %6, %cst {dimension_numbers = #tpu.dot_dimension_numbers<[1], [0], [0], [1], [0, 0, 1, 1], [], []>} : vector<64x128xbf16>, vector<128x256xbf16>, vector<64x256xf32> -> vector<64x256xf32>
    %cst_4 = arith.constant dense<0.000000e+00> : vector<256xf32>
    %8 = vector.multi_reduction <add>, %7, %cst_4 [0] : vector<64x256xf32> to vector<256xf32>
    %9 = vector.shape_cast %8 : vector<256xf32> to vector<1x256xf32>
    %cst_5 = arith.constant 1.562500e-02 : f32
    %10 = vector.broadcast %cst_5 : f32 to vector<1x256xf32>
    %11 = arith.mulf %9, %10 : vector<1x256xf32>
    %12 = vector.broadcast %11 : vector<1x256xf32> to vector<64x256xf32>
    %13 = arith.subf %7, %12 : vector<64x256xf32>
    %14 = arith.mulf %13, %13 : vector<64x256xf32>
    %cst_6 = arith.constant dense<0.000000e+00> : vector<256xf32>
    %15 = vector.multi_reduction <add>, %14, %cst_6 [0] : vector<64x256xf32> to vector<256xf32>
    %16 = vector.shape_cast %15 : vector<256xf32> to vector<1x256xf32>
    %cst_7 = arith.constant 1.562500e-02 : f32
    %17 = vector.broadcast %cst_7 : f32 to vector<1x256xf32>
    %18 = arith.mulf %16, %17 : vector<1x256xf32>
    %c0_8 = arith.constant 0 : index
    %c0_9 = arith.constant 0 : index
    %19 = vector.load %arg4[%c0_8, %c0_9] : memref<1x256xf32, #tpu.memory_space<vmem>>, vector<1x256xf32>
    %cst_10 = arith.constant 9.99999974E-6 : f32
    %20 = vector.broadcast %cst_10 : f32 to vector<1x256xf32>
    %21 = arith.addf %18, %20 : vector<1x256xf32>
    %22 = math.rsqrt %21 : vector<1x256xf32>
    %23 = arith.mulf %19, %22 : vector<1x256xf32>
    %24 = vector.broadcast %23 : vector<1x256xf32> to vector<64x256xf32>
    %25 = arith.mulf %13, %24 : vector<64x256xf32>
    %c0_11 = arith.constant 0 : index
    %c0_12 = arith.constant 0 : index
    %26 = vector.load %arg5[%c0_11, %c0_12] : memref<1x256xf32, #tpu.memory_space<vmem>>, vector<1x256xf32>
    %27 = vector.broadcast %26 : vector<1x256xf32> to vector<64x256xf32>
    %28 = arith.addf %25, %27 : vector<64x256xf32>
    %cst_13 = arith.constant 0.000000e+00 : f32
    %29 = vector.broadcast %cst_13 : f32 to vector<64x256xf32>
    %30 = arith.maximumf %28, %29 : vector<64x256xf32>
    %c0_14 = arith.constant 0 : index
    %c0_15 = arith.constant 0 : index
    %31 = vector.load %arg7[%c0_14, %c0_15] : memref<64x256xf32, #tpu.memory_space<vmem>>, vector<64x256xf32>
    %32 = arith.truncf %30 : vector<64x256xf32> to vector<64x256xbf16>
    %c0_16 = arith.constant 0 : index
    %c0_17 = arith.constant 0 : index
    %33 = vector.load %arg6[%c0_16, %c0_17] : memref<256x256xf32, #tpu.memory_space<vmem>>, vector<256x256xf32>
    %34 = arith.truncf %33 : vector<256x256xf32> to vector<256x256xbf16>
    %cst_18 = arith.constant dense<0.000000e+00> : vector<64x256xf32>
    %35 = tpu.matmul %32, %34, %cst_18 {dimension_numbers = #tpu.dot_dimension_numbers<[1], [0], [0], [1], [0, 0, 1, 1], [], []>} : vector<64x256xbf16>, vector<256x256xbf16>, vector<64x256xf32> -> vector<64x256xf32>
    %36 = arith.addf %31, %35 : vector<64x256xf32>
    %c0_19 = arith.constant 0 : index
    %c0_20 = arith.constant 0 : index
    %37 = vector.load %arg7[%c0_19, %c0_20] : memref<64x256xf32, #tpu.memory_space<vmem>>, vector<64x256xf32>
    tpu.vector_store %arg7[%c0_19, %c0_20], %36 {strides = array<i32>} : memref<64x256xf32, #tpu.memory_space<vmem>>, vector<64x256xf32>,
    %c1_i32 = arith.constant 1 : i32
    %38 = arith.cmpi eq, %arg1, %c1_i32 : i32
    %39 = arith.extui %38 : i1 to i32
    %c0_i32_21 = arith.constant 0 : i32
    %40 = arith.cmpi ne, %39, %c0_i32_21 : i32
    scf.if %40 {
      %c0_22 = arith.constant 0 : index
      %c0_23 = arith.constant 0 : index
      %41 = vector.load %arg7[%c0_22, %c0_23] : memref<64x256xf32, #tpu.memory_space<vmem>>, vector<64x256xf32>
      %cst_24 = arith.constant dense<0.000000e+00> : vector<256xf32>
      %42 = vector.multi_reduction <add>, %41, %cst_24 [0] : vector<64x256xf32> to vector<256xf32>
      %43 = vector.shape_cast %42 : vector<256xf32> to vector<1x256xf32>
      %cst_25 = arith.constant 1.562500e-02 : f32
      %44 = vector.broadcast %cst_25 : f32 to vector<1x256xf32>
      %45 = arith.mulf %43, %44 : vector<1x256xf32>
      %46 = vector.broadcast %45 : vector<1x256xf32> to vector<64x256xf32>
      %47 = arith.subf %41, %46 : vector<64x256xf32>
      %48 = arith.mulf %47, %47 : vector<64x256xf32>
      %cst_26 = arith.constant dense<0.000000e+00> : vector<256xf32>
      %49 = vector.multi_reduction <add>, %48, %cst_26 [0] : vector<64x256xf32> to vector<256xf32>
      %50 = vector.shape_cast %49 : vector<256xf32> to vector<1x256xf32>
      %cst_27 = arith.constant 1.562500e-02 : f32
      %51 = vector.broadcast %cst_27 : f32 to vector<1x256xf32>
      %52 = arith.mulf %50, %51 : vector<1x256xf32>
      %cst_28 = arith.constant 9.99999974E-6 : f32
      %53 = vector.broadcast %cst_28 : f32 to vector<1x256xf32>
      %54 = arith.addf %52, %53 : vector<1x256xf32>
      %55 = math.rsqrt %54 : vector<1x256xf32>
      %56 = vector.broadcast %55 : vector<1x256xf32> to vector<64x256xf32>
      %57 = arith.mulf %47, %56 : vector<64x256xf32>
      %c0_29 = arith.constant 0 : index
      %c0_30 = arith.constant 0 : index
      %58 = vector.load %arg7[%c0_29, %c0_30] : memref<64x256xf32, #tpu.memory_space<vmem>>, vector<64x256xf32>
      tpu.vector_store %arg7[%c0_29, %c0_30], %57 {strides = array<i32>} : memref<64x256xf32, #tpu.memory_space<vmem>>, vector<64x256xf32>,
    } else {
    }
    return
  }
  func.func @transform_0(%arg0: i32, %arg1: i32) -> (i32, i32) {
    %c0_i32 = arith.constant 0 : i32
    %c0_i32_0 = arith.constant 0 : i32
    %c0_i32_1 = arith.constant 0 : i32
    return %c0_i32, %c0_i32_0 : i32, i32
  }
  func.func @transform_1(%arg0: i32, %arg1: i32) -> (i32, i32) {
    %c0_i32 = arith.constant 0 : i32
    %c0_i32_0 = arith.constant 0 : i32
    return %c0_i32, %arg1 : i32, i32
  }
  func.func @transform_2(%arg0: i32, %arg1: i32) -> (i32, i32) {
    %c0_i32 = arith.constant 0 : i32
    %c0_i32_0 = arith.constant 0 : i32
    return %c0_i32, %arg1 : i32, i32
  }
  func.func @transform_3(%arg0: i32, %arg1: i32) -> (i32, i32) {
    %c0_i32 = arith.constant 0 : i32
    %c0_i32_0 = arith.constant 0 : i32
    return %c0_i32, %arg1 : i32, i32
  }
  func.func @transform_4(%arg0: i32, %arg1: i32) -> (i32, i32) {
    %c0_i32 = arith.constant 0 : i32
    return %arg1, %arg0 : i32, i32
  }
  func.func @transform_5(%arg0: i32, %arg1: i32) -> (i32, i32) {
    %c0_i32 = arith.constant 0 : i32
    %c0_i32_0 = arith.constant 0 : i32
    return %c0_i32, %arg0 : i32, i32
  }
}

</mosaic_0001>

<llo_original>
// kernel: tpu_custom_call.1
$region0: #{tpu_custom_call.1}
  #allocation0 [shape = 'u32[]', space=smem, size = 0x4, offset = 0x4, fixed_abs, tag = 'smem constant byte address 0x4 - core index']
  #allocation1 [shape = 'u32[144,128]{1,0:T(1,128)}', space=vmem, size = 0x12000, scoped, tag = 'internal scratch']
  %s0 = inlined_call_operand.hbm [shape: f32[64,128], index: 0, kind: input, shape index: {}]
  %s1 = inlined_call_operand.hbm [shape: f32[128,512], index: 1, kind: input, shape index: {}]
  %s2 = inlined_call_operand.hbm [shape: f32[1,512], index: 2, kind: input, shape index: {}]
  %s3 = inlined_call_operand.vmem [shape: f32[1,512], index: 3, kind: input, shape index: {}]
  %s4 = inlined_call_operand.hbm [shape: f32[512,256], index: 4, kind: input, shape index: {}]
  %s5 = inlined_call_operand.hbm [shape: f32[64,256], index: 5, kind: output, shape index: {}]
  %s6 = sld [smem:[#allocation0]]
  $region77: #{tpu_custom_call.1} parent=0
    _
  %s8 = ssub.s32 1, %s6
  %s9 = scalar_select 0, %s8, %s6
  $region1: #{tpu_custom_call.1} parent=0
    #allocation2 [shape = 'u8[32768]{0}', space=vmem, size = 0x8000, scoped, tag = 'input window, operand 0, single buffered']
    #allocation3 [shape = 's32[2]{0}', space=sflag, size = 0x8, scoped, tag = 'scoped memory for tpu_custom_call.1']
    #allocation4 [shape = 's32[2]{0}', space=sflag, size = 0x8, scoped, tag = 'scoped memory for tpu_custom_call.1']
    #allocation5 [shape = 'u8[262144]{0}', space=vmem, size = 0x40000, scoped, tag = 'input window, operand 1']
    #allocation6 [shape = 's32[2]{0}', space=sflag, size = 0x8, scoped, tag = 'scoped memory for tpu_custom_call.1']
    #allocation7 [shape = 'u8[2048]{0}', space=vmem, size = 0x800, scoped, tag = 'input window, operand 2']
    #allocation8 [shape = 'u8[524288]{0}', space=vmem, size = 0x80000, scoped, tag = 'input window, operand 4']
    #allocation9 [shape = 's32[2]{0}', space=sflag, size = 0x8, scoped, tag = 'scoped memory for tpu_custom_call.1']
    #allocation10 [shape = 'u8[65536]{0}', space=vmem, size = 0x10000, scoped, tag = 'output window, operand 0, single buffered']
    %10 = vsyncpa [#allocation3], 0
    %11 = vsyncpa [#allocation6], 0
    %s12 = scalar_lea.sflag [#allocation6], 1
    %13 = vsyncpa %s12, 0
    %14 = vsyncpa [#allocation9], 0
    %s15 = scalar_lea.sflag [#allocation9], 1
    %16 = vsyncpa %s15, 0
    %17 = vsyncpa [#allocation4], 0
    loop: start=0, step=1, limit=4
    $region2: #{tpu_custom_call.1} parent=1 // loop_pre_header
      _
    $region3: #{tpu_custom_call.1} parent=1 // loop_header
      %s19 = sphi 0, %s23
      %p20 = scmp.ge.s32.totalorder %s19, 4
      %s26 = sphi 0, %s38
      %s27 = sphi 0, %s34
      %s28 = sphi 0, %s26
      %s29 = sphi 0, %s27
      %s30 = sphi 0, %s28
      %s31 = sphi 0, %s29
      %s39 = sphi 0, %s39
      %s41 = sphi 0, %s39
      %s42 = sphi 0, %s41
      %s56 = sphi 0, %s42
      %s62 = sphi 0, %s64
      %s65 = sphi 0, %s62
      %s66 = sphi 0, %s65
      %s82 = sphi 0, %s66
      %s88 = sphi 0, %s90
      %s91 = sphi 0, %s88
      %s92 = sphi 0, %s91
      %s108 = sphi 0, %s92
      %s114 = sphi 0, %s116
      %s117 = sphi 0, %s114
      %s118 = sphi 0, %s117
      %s134 = sphi 0, %s118
      %s142 = sphi 0, %s144
      %s145 = sphi 0, %s142
      %s146 = sphi 0, %s145
      %s162 = sphi 0, %s146
      %s168 = sphi 0, %s170
      %s171 = sphi 0, %s168
      %s172 = sphi 0, %s171
      %s188 = sphi 0, %s172
    $region4: #{tpu_custom_call.1} parent=1 // loop_header_branch
      %22 = sbr.rel (%p20) target = $region8
    $region5: #{tpu_custom_call.1} parent=1 // loop_body
      %s24 = ssub.s32 %s19, 1
      %s25 = ssub.s32 %s19, 2
      %s32 = sadd.s32 1, %s27
      %p33 = scmp.ge.s32.totalorder %s32, 2
      %s34 = scalar_select %p33, 0, %s32
      %s35 = sadd.s32 1, %s26
      %s36 = scalar_select %p33, %s35, %s26
      %p37 = scmp.ge.s32.totalorder %s36, 1
      %s38 = scalar_select %p37, 0, %s36
      %s40 = sadd.s32 %s39, 1
      %p43 = scmp.eq.s32.totalorder %s19, 1
      %p44 = scmp.ne.s32.totalorder %s39, %s41
      %p45 = scmp.eq.s32.totalorder %s19, 0
      %p46 = por %p44, %p45
      %p47 = scmp.ne.s32.totalorder %s39, %s41
      %p48 = scmp.eq.s32.totalorder %s24, 1
      %p49 = por %p47, %p48
      %p50 = scmp.ne.s32.totalorder %s41, %s42
      %p51 = scmp.eq.s32.totalorder %s24, 0
      %p52 = por %p50, %p51
      %p53 = scmp.ne.s32.totalorder %s41, %s42
      %p54 = scmp.eq.s32.totalorder %s25, 1
      %p55 = por %p53, %p54
      %p57 = scmp.ne.s32.totalorder %s42, %s56
      %p58 = scmp.eq.s32.totalorder %s25, 0
      %p59 = por %p57, %p58
      %s60 = ssub.s32 %s27, %s34
      %p61 = scmp.eq.s32.totalorder %s60, 0
      %s63 = sadd.s32 %s62, 1
      %s64 = scalar_select %p61, %s62, %s63
      %p67 = pneg %p61
      %p68 = scmp.eq.s32.totalorder %s19, 1
      %p69 = por %p67, %p68
      %p70 = scmp.ne.s32.totalorder %s62, %s65
      %p71 = scmp.eq.s32.totalorder %s19, 0
      %p72 = por %p70, %p71
      %p73 = scmp.ne.s32.totalorder %s62, %s65
      %p74 = scmp.eq.s32.totalorder %s24, 1
      %p75 = por %p73, %p74
      %p76 = scmp.ne.s32.totalorder %s65, %s66
      %p77 = scmp.eq.s32.totalorder %s24, 0
      %p78 = por %p76, %p77
      %p79 = scmp.ne.s32.totalorder %s65, %s66
      %p80 = scmp.eq.s32.totalorder %s25, 1
      %p81 = por %p79, %p80
      %p83 = scmp.ne.s32.totalorder %s66, %s82
      %p84 = scmp.eq.s32.totalorder %s25, 0
      %p85 = por %p83, %p84
      %s86 = ssub.s32 %s27, %s34
      %p87 = scmp.eq.s32.totalorder %s86, 0
      %s89 = sadd.s32 %s88, 1
      %s90 = scalar_select %p87, %s88, %s89
      %p93 = pneg %p87
      %p94 = scmp.eq.s32.totalorder %s19, 1
      %p95 = por %p93, %p94
      %p96 = scmp.ne.s32.totalorder %s88, %s91
      %p97 = scmp.eq.s32.totalorder %s19, 0
      %p98 = por %p96, %p97
      %p99 = scmp.ne.s32.totalorder %s88, %s91
      %p100 = scmp.eq.s32.totalorder %s24, 1
      %p101 = por %p99, %p100
      %p102 = scmp.ne.s32.totalorder %s91, %s92
      %p103 = scmp.eq.s32.totalorder %s24, 0
      %p104 = por %p102, %p103
      %p105 = scmp.ne.s32.totalorder %s91, %s92
      %p106 = scmp.eq.s32.totalorder %s25, 1
      %p107 = por %p105, %p106
      %p109 = scmp.ne.s32.totalorder %s92, %s108
      %p110 = scmp.eq.s32.totalorder %s25, 0
      %p111 = por %p109, %p110
      %s112 = ssub.s32 %s27, %s34
      %p113 = scmp.eq.s32.totalorder %s112, 0
      %s115 = sadd.s32 %s114, 1
      %s116 = scalar_select %p113, %s114, %s115
      %p119 = pneg %p113
      %p120 = scmp.eq.s32.totalorder %s19, 1
      %p121 = por %p119, %p120
      %p122 = scmp.ne.s32.totalorder %s114, %s117
      %p123 = scmp.eq.s32.totalorder %s19, 0
      %p124 = por %p122, %p123
      %p125 = scmp.ne.s32.totalorder %s114, %s117
      %p126 = scmp.eq.s32.totalorder %s24, 1
      %p127 = por %p125, %p126
      %p128 = scmp.ne.s32.totalorder %s117, %s118
      %p129 = scmp.eq.s32.totalorder %s24, 0
      %p130 = por %p128, %p129
      %p131 = scmp.ne.s32.totalorder %s117, %s118
      %p132 = scmp.eq.s32.totalorder %s25, 1
      %p133 = por %p131, %p132
      %p135 = scmp.ne.s32.totalorder %s118, %s134
      %p136 = scmp.eq.s32.totalorder %s25, 0
      %p137 = por %p135, %p136
      %s138 = ssub.s32 %s27, %s34
      %s139 = ssub.s32 %s26, %s38
      %s140 = sor.u32 %s138, %s139
      %p141 = scmp.eq.s32.totalorder %s140, 0
      %s143 = sadd.s32 %s142, 1
      %s144 = scalar_select %p141, %s142, %s143
      %p147 = pneg %p141
      %p148 = scmp.eq.s32.totalorder %s19, 1
      %p149 = por %p147, %p148
      %p150 = scmp.ne.s32.totalorder %s142, %s145
      %p151 = scmp.eq.s32.totalorder %s19, 0
      %p152 = por %p150, %p151
      %p153 = scmp.ne.s32.totalorder %s142, %s145
      %p154 = scmp.eq.s32.totalorder %s24, 1
      %p155 = por %p153, %p154
      %p156 = scmp.ne.s32.totalorder %s145, %s146
      %p157 = scmp.eq.s32.totalorder %s24, 0
      %p158 = por %p156, %p157
      %p159 = scmp.ne.s32.totalorder %s145, %s146
      %p160 = scmp.eq.s32.totalorder %s25, 1
      %p161 = por %p159, %p160
      %p163 = scmp.ne.s32.totalorder %s146, %s162
      %p164 = scmp.eq.s32.totalorder %s25, 0
      %p165 = por %p163, %p164
      %s166 = ssub.s32 %s26, %s38
      %p167 = scmp.eq.s32.totalorder %s166, 0
      %s169 = sadd.s32 %s168, 1
      %s170 = scalar_select %p167, %s168, %s169
      %p173 = pneg %p167
      %p174 = scmp.eq.s32.totalorder %s19, 1
      %p175 = por %p173, %p174
      %p176 = scmp.ne.s32.totalorder %s168, %s171
      %p177 = scmp.eq.s32.totalorder %s19, 0
      %p178 = por %p176, %p177
      %p179 = scmp.ne.s32.totalorder %s168, %s171
      %p180 = scmp.eq.s32.totalorder %s24, 1
      %p181 = por %p179, %p180
      %p182 = scmp.ne.s32.totalorder %s171, %s172
      %p183 = scmp.eq.s32.totalorder %s24, 0
      %p184 = por %p182, %p183
      %p185 = scmp.ne.s32.totalorder %s171, %s172
      %p186 = scmp.eq.s32.totalorder %s25, 1
      %p187 = por %p185, %p186
      %p189 = scmp.ne.s32.totalorder %s172, %s188
      %p190 = scmp.eq.s32.totalorder %s25, 0
      %p191 = por %p189, %p190
      %p192 = scmp.le.s32.totalorder 1, %s19
      %p193 = scmp.lt.s32.totalorder %s19, 3
      %p194 = pnand %p192, %p193
      %p195 = pneg %p194
      // Predicated region
      $region9: #{tpu_custom_call.1} parent=5 // pred_check
        _
      $region10: #{tpu_custom_call.1} parent=5 // pred_check_branch
        %197 = sbr.rel (%p194) target = $region12
      $region11: #{tpu_custom_call.1} parent=5 // pred_region
        %s198 = ssub.s32 %s19, 1
        // Predicated region
        $region13: #{tpu_custom_call.1} parent=11 // pred_check
          %p199 = pneg %p52
        $region14: #{tpu_custom_call.1} parent=11 // pred_check_branch
          %201 = sbr.rel (%p199) target = $region16
        $region15: #{tpu_custom_call.1} parent=11 // pred_region
          %s203 = ssub.s32 1024, 1024
          %204 = vsyncadd [#allocation3], %s203
          %s205 = sshll.u32 [#allocation2], 4
          %s206 = int_to_ptr.vmem [resolvable:$true] %s205
          %211 = dma.hbm_to_vmem [thread:$0]  %s0, 1024, %s206, [#allocation3], 128, 128, 8
        $region16: #{tpu_custom_call.1} parent=11 // pred_fallthru
          _
      $region12: #{tpu_custom_call.1} parent=5 // pred_fallthru
        _
      %p212 = scmp.lt.s32.totalorder %s19, 2
      // Predicated region
      $region17: #{tpu_custom_call.1} parent=5 // pred_check
        %p213 = pneg %p212
      $region18: #{tpu_custom_call.1} parent=5 // pred_check_branch
        %215 = sbr.rel (%p213) target = $region20
      $region19: #{tpu_custom_call.1} parent=5 // pred_region
        // Predicated region
        $region21: #{tpu_custom_call.1} parent=19 // pred_check
          %p216 = pneg %p72
        $region22: #{tpu_custom_call.1} parent=19 // pred_check_branch
          %218 = sbr.rel (%p216) target = $region24
        $region23: #{tpu_custom_call.1} parent=19 // pred_region
          %s219 = sand.u32 %s19, 1
          %s220 = scalar_lea.sflag [#allocation6], %s219
          %s221 = sand.u32 %s62, 1
          %s222 = smul.addr %s221, 256
          %s223 = scalar_lea.vmem [#allocation5], %s222
          %s224 = smul.u32 2, %s27
          %s226 = ssub.s32 4096, 4096
          %227 = vsyncadd %s220, %s226
          %s228 = smul.addr %s224, 128
          %s229 = scalar_lea.hbm %s1, %s228
          %s230 = sshll.u32 %s223, 4
          %s231 = int_to_ptr.vmem [resolvable:$true] %s230
          %236 = dma.hbm_to_vmem [thread:$0]  %s229, 4096, %s231, %s220, 512, 256, 16
        $region24: #{tpu_custom_call.1} parent=19 // pred_fallthru
          _
        // Predicated region
        $region25: #{tpu_custom_call.1} parent=19 // pred_check
          %p237 = pneg %p98
        $region26: #{tpu_custom_call.1} parent=19 // pred_check_branch
          %239 = sbr.rel (%p237) target = $region28
        $region27: #{tpu_custom_call.1} parent=19 // pred_region
          %s240 = sand.u32 %s19, 1
          %s241 = scalar_lea.sflag [#allocation6], %s240
          %s242 = sand.u32 %s88, 1
          %s243 = smul.addr %s242, 2
          %s244 = scalar_lea.vmem [#allocation7], %s243
          %s245 = smul.u32 2, %s27
          %s247 = ssub.s32 32, 32
          %248 = vsyncadd %s241, %s247
          %s249 = smul.addr %s245, 16
          %s250 = scalar_lea.hbm %s2, %s249
          %s252 = sshll.u32 %s244, 4
          %s253 = int_to_ptr.vmem [resolvable:$true] %s252
          %255 = dma.hbm_to_vmem [thread:$0]  %s250, 32, %s253, %s241
        $region28: #{tpu_custom_call.1} parent=19 // pred_fallthru
          _
        // Predicated region
        $region29: #{tpu_custom_call.1} parent=19 // pred_check
          %p256 = pneg %p124
        $region30: #{tpu_custom_call.1} parent=19 // pred_check_branch
          %258 = sbr.rel (%p256) target = $region32
        $region31: #{tpu_custom_call.1} parent=19 // pred_region
          %s259 = smul.u32 2, %s27
          %p260 = scmp.lt.s32.totalorder %s259, 3
          %s261 = scalar_select %p260, %s259, 3
          %s262 = scalar_lea.vmem %s3, %s261
          %s263 = smul.u32 2, %s27
        $region32: #{tpu_custom_call.1} parent=19 // pred_fallthru
          _
        // Predicated region
        $region33: #{tpu_custom_call.1} parent=19 // pred_check
          %p264 = pneg %p152
        $region34: #{tpu_custom_call.1} parent=19 // pred_check_branch
          %266 = sbr.rel (%p264) target = $region36
        $region35: #{tpu_custom_call.1} parent=19 // pred_region
          %s267 = sand.u32 %s142, 1
          %s268 = scalar_lea.sflag [#allocation9], %s267
          %s269 = sand.u32 %s142, 1
          %s270 = smul.addr %s269, 512
          %s271 = scalar_lea.vmem [#allocation8], %s270
          %s272 = smul.u32 32, %s27
          %s273 = smul.u32 2, %s26
          %s275 = ssub.s32 8192, 8192
          %276 = vsyncadd %s268, %s275
          %s277 = smul.addr %s272, 2
          %s278 = sadd.s32 %s273, %s277
          %s279 = smul.addr %s278, 128
          %s280 = scalar_lea.hbm %s4, %s279
          %s281 = sshll.u32 %s271, 4
          %s282 = int_to_ptr.vmem [resolvable:$true] %s281
          %287 = dma.hbm_to_vmem [thread:$0]  %s280, 8192, %s282, %s268, 256, 256, 16
        $region36: #{tpu_custom_call.1} parent=19 // pred_fallthru
          _
      $region20: #{tpu_custom_call.1} parent=5 // pred_fallthru
        _
      %p288 = scmp.le.s32.totalorder 1, %s19
      %p289 = scmp.lt.s32.totalorder %s19, 3
      %p290 = pnand %p288, %p289
      %p291 = pneg %p290
      // Predicated region
      $region37: #{tpu_custom_call.1} parent=5 // pred_check
        _
      $region38: #{tpu_custom_call.1} parent=5 // pred_check_branch
        %293 = sbr.rel (%p290) target = $region40
      $region39: #{tpu_custom_call.1} parent=5 // pred_region
        %s294 = ssub.s32 %s19, 1
        // Predicated region
        $region41: #{tpu_custom_call.1} parent=39 // pred_check
          %p295 = pneg %p52
        $region42: #{tpu_custom_call.1} parent=39 // pred_check_branch
          %297 = sbr.rel (%p295) target = $region44
        $region43: #{tpu_custom_call.1} parent=39 // pred_region
          %298 = dma.done [#allocation3], 1024
        $region44: #{tpu_custom_call.1} parent=39 // pred_fallthru
          _
        %s299 = sand.u32 %s24, 1
        %s300 = scalar_lea.sflag [#allocation6], %s299
        %s301 = sand.u32 %s65, 1
        %s302 = smul.addr %s301, 256
        %s303 = scalar_lea.vmem [#allocation5], %s302
        // Predicated region
        $region45: #{tpu_custom_call.1} parent=39 // pred_check
          %p304 = pneg %p78
        $region46: #{tpu_custom_call.1} parent=39 // pred_check_branch
          %306 = sbr.rel (%p304) target = $region48
        $region47: #{tpu_custom_call.1} parent=39 // pred_region
          %307 = dma.done %s300, 4096
        $region48: #{tpu_custom_call.1} parent=39 // pred_fallthru
          _
        %s308 = sand.u32 %s24, 1
        %s309 = scalar_lea.sflag [#allocation6], %s308
        %s310 = sand.u32 %s91, 1
        %s311 = smul.addr %s310, 2
        %s312 = scalar_lea.vmem [#allocation7], %s311
        // Predicated region
        $region49: #{tpu_custom_call.1} parent=39 // pred_check
          %p313 = pneg %p104
        $region50: #{tpu_custom_call.1} parent=39 // pred_check_branch
          %315 = sbr.rel (%p313) target = $region52
        $region51: #{tpu_custom_call.1} parent=39 // pred_region
          %316 = dma.done %s309, 32
        $region52: #{tpu_custom_call.1} parent=39 // pred_fallthru
          _
        %s317 = sand.u32 %s145, 1
        %s318 = scalar_lea.sflag [#allocation9], %s317
        %s319 = sand.u32 %s145, 1
        %s320 = smul.addr %s319, 512
        %s321 = scalar_lea.vmem [#allocation8], %s320
        // Predicated region
        $region53: #{tpu_custom_call.1} parent=39 // pred_check
          %p322 = pneg %p158
        $region54: #{tpu_custom_call.1} parent=39 // pred_check_branch
          %324 = sbr.rel (%p322) target = $region56
        $region55: #{tpu_custom_call.1} parent=39 // pred_region
          %325 = dma.done %s318, 8192
        $region56: #{tpu_custom_call.1} parent=39 // pred_fallthru
          _
        %p326 = pneg %p52
        %p327 = pneg %p49
        %s328 = sand.u32 %s24, 1
        %s329 = scalar_lea.sflag [#allocation6], %s328
        %s330 = sand.u32 %s65, 1
        %s331 = smul.addr %s330, 256
        %s332 = scalar_lea.vmem [#allocation5], %s331
        %p333 = pneg %p78
        %p334 = pneg %p75
        %s335 = sand.u32 %s24, 1
        %s336 = scalar_lea.sflag [#allocation6], %s335
        %s337 = sand.u32 %s91, 1
        %s338 = smul.addr %s337, 2
        %s339 = scalar_lea.vmem [#allocation7], %s338
        %p340 = pneg %p104
        %p341 = pneg %p101
        %s342 = smul.u32 2, %s29
        %p343 = scmp.lt.s32.totalorder %s342, 3
        %s344 = scalar_select %p343, %s342, 3
        %s345 = scalar_lea.vmem %s3, %s344
        %p346 = pneg %p130
        %p347 = pneg %p127
        %s348 = sand.u32 %s145, 1
        %s349 = scalar_lea.sflag [#allocation9], %s348
        %s350 = sand.u32 %s145, 1
        %s351 = smul.addr %s350, 512
        %s352 = scalar_lea.vmem [#allocation8], %s351
        %p353 = pneg %p158
        %p354 = pneg %p155
        %p355 = pneg %p184
        %p356 = pneg %p181
        %s357 = smul.u32 2, %s29
        %s358 = smul.u32 2, %s29
        %s359 = smul.u32 2, %s29
        %p360 = scmp.lt.s32.totalorder %s359, 3
        %s361 = scalar_select %p360, %s359, 3
        %s362 = scalar_lea.vmem %s3, %s361
        %s363 = smul.u32 2, %s29
        %s364 = smul.u32 32, %s29
        %s365 = smul.u32 2, %s28
        %s366 = smul.u32 2, %s28
        %p368 = scmp.eq.s32.totalorder %s29, 0
        // Predicated region
        $region57: #{tpu_custom_call.1} parent=39 // pred_check
          %p369 = pneg %p368
        $region58: #{tpu_custom_call.1} parent=39 // pred_check_branch
          %371 = sbr.rel (%p369) target = $region60
        $region59: #{tpu_custom_call.1} parent=39 // pred_region
          %372 = vst [vmem:[#allocation10] sm:$0xff] 0.0
          %373 = vst [vmem:[#allocation10 + $0x8] sm:$0xff] 0.0
          %374 = vst [vmem:[#allocation10 + $0x10] sm:$0xff] 0.0
          %375 = vst [vmem:[#allocation10 + $0x18] sm:$0xff] 0.0
          %376 = vst [vmem:[#allocation10 + $0x20] sm:$0xff] 0.0
          %377 = vst [vmem:[#allocation10 + $0x28] sm:$0xff] 0.0
          %378 = vst [vmem:[#allocation10 + $0x30] sm:$0xff] 0.0
          %379 = vst [vmem:[#allocation10 + $0x38] sm:$0xff] 0.0
          %380 = vst [vmem:[#allocation10 + $0x40] sm:$0xff] 0.0
          %381 = vst [vmem:[#allocation10 + $0x48] sm:$0xff] 0.0
          %382 = vst [vmem:[#allocation10 + $0x50] sm:$0xff] 0.0
          %383 = vst [vmem:[#allocation10 + $0x58] sm:$0xff] 0.0
          %384 = vst [vmem:[#allocation10 + $0x60] sm:$0xff] 0.0
          %385 = vst [vmem:[#allocation10 + $0x68] sm:$0xff] 0.0
          %386 = vst [vmem:[#allocation10 + $0x70] sm:$0xff] 0.0
          %387 = vst [vmem:[#allocation10 + $0x78] sm:$0xff] 0.0
        $region60: #{tpu_custom_call.1} parent=39 // pred_fallthru
          _
        %v388 = vld [vmem:[#allocation2] sm:$0xff]
        %v389 = vld [vmem:[#allocation2 + $0x8] sm:$0xff]
        %v390 = vld [vmem:[#allocation2 + $0x10] sm:$0xff]
        %v391 = vld [vmem:[#allocation2 + $0x18] sm:$0xff]
        %v392 = vld [vmem:[#allocation2 + $0x20] sm:$0xff]
        %v393 = vld [vmem:[#allocation2 + $0x28] sm:$0xff]
        %v394 = vld [vmem:[#allocation2 + $0x30] sm:$0xff]
        %v395 = vld [vmem:[#allocation2 + $0x38] sm:$0xff]
        %v396 = vpack.c.bf16 %v389, %v388
        %v397 = vpack.c.bf16 %v391, %v390
        %v398 = vpack.c.bf16 %v393, %v392
        %v399 = vpack.c.bf16 %v395, %v394
        %v400 = vld [vmem:[%s303] sm:$0xff]
        %v401 = vld [vmem:[%s303 + $0x8] sm:$0xff]
        %v402 = vld [vmem:[%s303 + $0x10] sm:$0xff]
        %v403 = vld [vmem:[%s303 + $0x18] sm:$0xff]
        %v404 = vld [vmem:[%s303 + $0x20] sm:$0xff]
        %v405 = vld [vmem:[%s303 + $0x28] sm:$0xff]
        %v406 = vld [vmem:[%s303 + $0x30] sm:$0xff]
        %v407 = vld [vmem:[%s303 + $0x38] sm:$0xff]
        %v408 = vld [vmem:[%s303 + $0x40] sm:$0xff]
        %v409 = vld [vmem:[%s303 + $0x48] sm:$0xff]
        %v410 = vld [vmem:[%s303 + $0x50] sm:$0xff]
        %v411 = vld [vmem:[%s303 + $0x58] sm:$0xff]
        %v412 = vld [vmem:[%s303 + $0x60] sm:$0xff]
        %v413 = vld [vmem:[%s303 + $0x68] sm:$0xff]
        %v414 = vld [vmem:[%s303 + $0x70] sm:$0xff]
        %v415 = vld [vmem:[%s303 + $0x78] sm:$0xff]
        %v416 = vld [vmem:[%s303 + $0x80] sm:$0xff]
        %v417 = vld [vmem:[%s303 + $0x88] sm:$0xff]
        %v418 = vld [vmem:[%s303 + $0x90] sm:$0xff]
        %v419 = vld [vmem:[%s303 + $0x98] sm:$0xff]
        %v420 = vld [vmem:[%s303 + $0xa0] sm:$0xff]
        %v421 = vld [vmem:[%s303 + $0xa8] sm:$0xff]
        %v422 = vld [vmem:[%s303 + $0xb0] sm:$0xff]
        %v423 = vld [vmem:[%s303 + $0xb8] sm:$0xff]
        %v424 = vld [vmem:[%s303 + $0xc0] sm:$0xff]
        %v425 = vld [vmem:[%s303 + $0xc8] sm:$0xff]
        %v426 = vld [vmem:[%s303 + $0xd0] sm:$0xff]
        %v427 = vld [vmem:[%s303 + $0xd8] sm:$0xff]
        %v428 = vld [vmem:[%s303 + $0xe0] sm:$0xff]
        %v429 = vld [vmem:[%s303 + $0xe8] sm:$0xff]
        %v430 = vld [vmem:[%s303 + $0xf0] sm:$0xff]
        %v431 = vld [vmem:[%s303 + $0xf8] sm:$0xff]
        %v432 = vpack.c.bf16 %v402, %v400
        %v433 = vpack.c.bf16 %v403, %v401
        %v434 = vpack.c.bf16 %v406, %v404
        %v435 = vpack.c.bf16 %v407, %v405
        %v436 = vpack.c.bf16 %v410, %v408
        %v437 = vpack.c.bf16 %v411, %v409
        %v438 = vpack.c.bf16 %v414, %v412
        %v439 = vpack.c.bf16 %v415, %v413
        %v440 = vpack.c.bf16 %v418, %v416
        %v441 = vpack.c.bf16 %v419, %v417
        %v442 = vpack.c.bf16 %v422, %v420
        %v443 = vpack.c.bf16 %v423, %v421
        %v444 = vpack.c.bf16 %v426, %v424
        %v445 = vpack.c.bf16 %v427, %v425
        %v446 = vpack.c.bf16 %v430, %v428
        %v447 = vpack.c.bf16 %v431, %v429
        %448 = vmatprep.subr.bf16.mxu0 %v447
        %449 = vmatpush1.bf16.msra.mxu0 %v446
        %450 = vmatprep.subr.bf16.mxu0 %v445
        %451 = vmatpush1.bf16.msra.mxu0 %v444
        %452 = vmatprep.subr.bf16.mxu0 %v443
        %453 = vmatpush1.bf16.msra.mxu0 %v442
        %454 = vmatprep.subr.bf16.mxu0 %v441
        %455 = vmatpush1.bf16.msra.mxu0 %v440
        %456 = vmatprep.subr.bf16.mxu0 %v439
        %457 = vmatpush1.bf16.msra.mxu0 %v438
        %458 = vmatprep.subr.bf16.mxu0 %v437
        %459 = vmatpush1.bf16.msra.mxu0 %v436
        %460 = vmatprep.subr.bf16.mxu0 %v435
        %461 = vmatpush1.bf16.msra.mxu0 %v434
        %462 = vmatprep.subr.bf16.mxu0 %v433
        %463 = vmatpush1.bf16.msra.mxu0 %v432
        %464 = vmatprep.subr.bf16.mxu0 0
        %465 = vmatpush2.bf16.msra.mxu0 0
        %466 = vmatprep.subr.bf16.mxu0 0
        %467 = vmatpush2.bf16.msra.mxu0 0
        %468 = vmatprep.subr.bf16.mxu0 0
        %469 = vmatpush2.bf16.msra.mxu0 0
        %470 = vmatprep.subr.bf16.mxu0 0
        %471 = vmatpush2.bf16.msra.mxu0 0
        %472 = vmatprep.subr.bf16.mxu0 0
        %473 = vmatpush2.bf16.msra.mxu0 0
        %474 = vmatprep.subr.bf16.mxu0 0
        %475 = vmatpush2.bf16.msra.mxu0 0
        %476 = vmatprep.subr.bf16.mxu0 0
        %477 = vmatpush2.bf16.msra.mxu0 0
        %478 = vmatprep.subr.bf16.mxu0 0
        %479 = vmatpush2.bf16.msra.mxu0 0
        %480 = vmatprep.mubr.bf16.mxu0 0
        %481 = vmatmul.mubr.bf16.gmra.mxu0 %v396
        %v482 = vpop.f32.mrf.mxu0
        %v483 = vadd.f32 0.0, %v482
        %v484 = vpop.f32.mrf.mxu0
        %v485 = vadd.f32 0.0, %v484
        %v486 = vpop.f32.mrf.mxu0
        %v487 = vadd.f32 0.0, %v486
        %v488 = vpop.f32.mrf.mxu0
        %v489 = vadd.f32 0.0, %v488
        %490 = vmatprep.mubr.bf16.mxu0 0
        %491 = vmatmul.mubr.bf16.gmra.mxu0 %v397
        %v492 = vpop.f32.mrf.mxu0
        %v493 = vadd.f32 0.0, %v492
        %v494 = vpop.f32.mrf.mxu0
        %v495 = vadd.f32 0.0, %v494
        %v496 = vpop.f32.mrf.mxu0
        %v497 = vadd.f32 0.0, %v496
        %v498 = vpop.f32.mrf.mxu0
        %v499 = vadd.f32 0.0, %v498
        %500 = vmatprep.mubr.bf16.mxu0 0
        %501 = vmatmul.mubr.bf16.gmra.mxu0 %v398
        %v502 = vpop.f32.mrf.mxu0
        %v503 = vadd.f32 0.0, %v502
        %v504 = vpop.f32.mrf.mxu0
        %v505 = vadd.f32 0.0, %v504
        %v506 = vpop.f32.mrf.mxu0
        %v507 = vadd.f32 0.0, %v506
        %v508 = vpop.f32.mrf.mxu0
        %v509 = vadd.f32 0.0, %v508
        %510 = vmatprep.mubr.bf16.mxu0 0
        %511 = vmatmul.mubr.bf16.gmra.mxu0 %v399
        %v512 = vpop.f32.mrf.mxu0
        %v513 = vadd.f32 0.0, %v512
        %v514 = vpop.f32.mrf.mxu0
        %v515 = vadd.f32 0.0, %v514
        %v516 = vpop.f32.mrf.mxu0
        %v517 = vadd.f32 0.0, %v516
        %v518 = vpop.f32.mrf.mxu0
        %v519 = vadd.f32 0.0, %v518
        %520 = vdwg.mxu0
        %v521 = vadd.f32 %v483, %v487
        %v522 = vadd.f32 %v521, %v493
        %v523 = vadd.f32 %v522, %v497
        %v524 = vadd.f32 %v523, %v503
        %v525 = vadd.f32 %v524, %v507
        %v526 = vadd.f32 %v525, %v513
        %v527 = vadd.f32 %v526, %v517
        %v528 = vrot.slane %v527, 4
        %v529 = vadd.f32 %v527, %v528
        %v530 = vrot.slane %v529, 2
        %v531 = vadd.f32 %v529, %v530
        %v532 = vrot.slane %v531, 1
        %v533 = vadd.f32 %v531, %v532
        %v534 = vadd.f32 %v485, %v489
        %v535 = vadd.f32 %v534, %v495
        %v536 = vadd.f32 %v535, %v499
        %v537 = vadd.f32 %v536, %v505
        %v538 = vadd.f32 %v537, %v509
        %v539 = vadd.f32 %v538, %v515
        %v540 = vadd.f32 %v539, %v519
        %v541 = vrot.slane %v540, 4
        %v542 = vadd.f32 %v540, %v541
        %v543 = vrot.slane %v542, 2
        %v544 = vadd.f32 %v542, %v543
        %v545 = vrot.slane %v544, 1
        %v546 = vadd.f32 %v544, %v545
        %v547 = vmul.f32 %v533, 0.015625
        %v548 = vmul.f32 %v546, 0.015625
        %v549 = vsub.f32 %v483, %v547
        %v550 = vsub.f32 %v485, %v548
        %v551 = vsub.f32 %v487, %v547
        %v552 = vsub.f32 %v489, %v548
        %v553 = vsub.f32 %v493, %v547
        %v554 = vsub.f32 %v495, %v548
        %v555 = vsub.f32 %v497, %v547
        %v556 = vsub.f32 %v499, %v548
        %v557 = vsub.f32 %v503, %v547
        %v558 = vsub.f32 %v505, %v548
        %v559 = vsub.f32 %v507, %v547
        %v560 = vsub.f32 %v509, %v548
        %v561 = vsub.f32 %v513, %v547
        %v562 = vsub.f32 %v515, %v548
        %v563 = vsub.f32 %v517, %v547
        %v564 = vsub.f32 %v519, %v548
        %v565 = vmul.f32 %v549, %v549
        %v566 = vmul.f32 %v550, %v550
        %v567 = vmul.f32 %v551, %v551
        %v568 = vmul.f32 %v552, %v552
        %v569 = vmul.f32 %v553, %v553
        %v570 = vmul.f32 %v554, %v554
        %v571 = vmul.f32 %v555, %v555
        %v572 = vmul.f32 %v556, %v556
        %v573 = vmul.f32 %v557, %v557
        %v574 = vmul.f32 %v558, %v558
        %v575 = vmul.f32 %v559, %v559
        %v576 = vmul.f32 %v560, %v560
        %v577 = vmul.f32 %v561, %v561
        %v578 = vmul.f32 %v562, %v562
        %v579 = vmul.f32 %v563, %v563
        %v580 = vmul.f32 %v564, %v564
        %v581 = vadd.f32 %v565, %v567
        %v582 = vadd.f32 %v581, %v569
        %v583 = vadd.f32 %v582, %v571
        %v584 = vadd.f32 %v583, %v573
        %v585 = vadd.f32 %v584, %v575
        %v586 = vadd.f32 %v585, %v577
        %v587 = vadd.f32 %v586, %v579
        %v588 = vrot.slane %v587, 4
        %v589 = vadd.f32 %v587, %v588
        %v590 = vrot.slane %v589, 2
        %v591 = vadd.f32 %v589, %v590
        %v592 = vrot.slane %v591, 1
        %v593 = vadd.f32 %v591, %v592
        %v594 = vadd.f32 %v566, %v568
        %v595 = vadd.f32 %v594, %v570
        %v596 = vadd.f32 %v595, %v572
        %v597 = vadd.f32 %v596, %v574
        %v598 = vadd.f32 %v597, %v576
        %v599 = vadd.f32 %v598, %v578
        %v600 = vadd.f32 %v599, %v580
        %v601 = vrot.slane %v600, 4
        %v602 = vadd.f32 %v600, %v601
        %v603 = vrot.slane %v602, 2
        %v604 = vadd.f32 %v602, %v603
        %v605 = vrot.slane %v604, 1
        %v606 = vadd.f32 %v604, %v605
        %v607 = vmul.f32 %v593, 0.015625
        %v608 = vmul.f32 %v606, 0.015625
        %v609 = vld [vmem:[%s312] sm:$0x3]
        %v610 = vadd.f32 %v607, 1e-05
        %v611 = vadd.f32 %v608, 1e-05
        %v612 = vrsqrt.pop %v610
        %v613 = vrsqrt.pop %v611
        %v616 = vcombine.low %v612, %v613
        %v618 = vunpack.c.l.s4 1966171168
        %v619 = vunpack.c.0.s8 %v618
        %v620 = vlaneseq
        %v621 = vshrl.u32 %v620, 7
        %v622 = vsub.s32 %v619, %v621
        %v623 = vrot.slane %v616, %v622
        %v625 = vunpack.c.l.s4 1966171168
        %v626 = vunpack.c.0.s8 %v625
        %v627 = vlaneseq
        %v628 = vshrl.u32 %v627, 7
        %v629 = vsub.s32 %v626, %v628
        %v630 = vrot.slane %v623, %v629
        %v632 = vmul.f32 %v609, %v630
        %v634 = vlaneseq
        %v635 = vshrl.u32 %v634, 7
        %v636 = vsub.s32 0, %v635
        %v637 = vrot.slane %v632, %v636
        %v638 = vlaneseq
        %v639 = vshrl.u32 %v638, 7
        %v640 = vsub.s32 1, %v639
        %v641 = vrot.slane %v632, %v640
        %v644 = vmul.f32 %v549, %v637
        %v645 = vmul.f32 %v550, %v641
        %v646 = vmul.f32 %v551, %v637
        %v647 = vmul.f32 %v552, %v641
        %v648 = vmul.f32 %v553, %v637
        %v649 = vmul.f32 %v554, %v641
        %v650 = vmul.f32 %v555, %v637
        %v651 = vmul.f32 %v556, %v641
        %v652 = vmul.f32 %v557, %v637
        %v653 = vmul.f32 %v558, %v641
        %v654 = vmul.f32 %v559, %v637
        %v655 = vmul.f32 %v560, %v641
        %v656 = vmul.f32 %v561, %v637
        %v657 = vmul.f32 %v562, %v641
        %v658 = vmul.f32 %v563, %v637
        %v659 = vmul.f32 %v564, %v641
        %v660 = vld [vmem:[%s362] sm:$0x3]
        %v662 = vlaneseq
        %v663 = vshrl.u32 %v662, 7
        %v664 = vsub.s32 0, %v663
        %v665 = vrot.slane %v660, %v664
        %v666 = vlaneseq
        %v667 = vshrl.u32 %v666, 7
        %v668 = vsub.s32 1, %v667
        %v669 = vrot.slane %v660, %v668
        %v672 = vadd.f32 %v644, %v665
        %v673 = vadd.f32 %v645, %v669
        %v674 = vadd.f32 %v646, %v665
        %v675 = vadd.f32 %v647, %v669
        %v676 = vadd.f32 %v648, %v665
        %v677 = vadd.f32 %v649, %v669
        %v678 = vadd.f32 %v650, %v665
        %v679 = vadd.f32 %v651, %v669
        %v680 = vadd.f32 %v652, %v665
        %v681 = vadd.f32 %v653, %v669
        %v682 = vadd.f32 %v654, %v665
        %v683 = vadd.f32 %v655, %v669
        %v684 = vadd.f32 %v656, %v665
        %v685 = vadd.f32 %v657, %v669
        %v686 = vadd.f32 %v658, %v665
        %v687 = vadd.f32 %v659, %v669
        %v688 = vmax.f32 %v672, 0.0
        %v689 = vmax.f32 %v673, 0.0
        %v690 = vmax.f32 %v674, 0.0
        %v691 = vmax.f32 %v675, 0.0
        %v692 = vmax.f32 %v676, 0.0
        %v693 = vmax.f32 %v677, 0.0
        %v694 = vmax.f32 %v678, 0.0
        %v695 = vmax.f32 %v679, 0.0
        %v696 = vmax.f32 %v680, 0.0
        %v697 = vmax.f32 %v681, 0.0
        %v698 = vmax.f32 %v682, 0.0
        %v699 = vmax.f32 %v683, 0.0
        %v700 = vmax.f32 %v684, 0.0
        %v701 = vmax.f32 %v685, 0.0
        %v702 = vmax.f32 %v686, 0.0
        %v703 = vmax.f32 %v687, 0.0
        %v704 = vld [vmem:[#allocation10] sm:$0xff]
        %v705 = vld [vmem:[#allocation10 + $0x8] sm:$0xff]
        %v706 = vld [vmem:[#allocation10 + $0x10] sm:$0xff]
        %v707 = vld [vmem:[#allocation10 + $0x18] sm:$0xff]
        %v708 = vld [vmem:[#allocation10 + $0x20] sm:$0xff]
        %v709 = vld [vmem:[#allocation10 + $0x28] sm:$0xff]
        %v710 = vld [vmem:[#allocation10 + $0x30] sm:$0xff]
        %v711 = vld [vmem:[#allocation10 + $0x38] sm:$0xff]
        %v712 = vld [vmem:[#allocation10 + $0x40] sm:$0xff]
        %v713 = vld [vmem:[#allocation10 + $0x48] sm:$0xff]
        %v714 = vld [vmem:[#allocation10 + $0x50] sm:$0xff]
        %v715 = vld [vmem:[#allocation10 + $0x58] sm:$0xff]
        %v716 = vld [vmem:[#allocation10 + $0x60] sm:$0xff]
        %v717 = vld [vmem:[#allocation10 + $0x68] sm:$0xff]
        %v718 = vld [vmem:[#allocation10 + $0x70] sm:$0xff]
        %v719 = vld [vmem:[#allocation10 + $0x78] sm:$0xff]
        %v720 = vpack.c.bf16 %v690, %v688
        %v721 = vpack.c.bf16 %v691, %v689
        %v722 = vpack.c.bf16 %v694, %v692
        %v723 = vpack.c.bf16 %v695, %v693
        %v724 = vpack.c.bf16 %v698, %v696
        %v725 = vpack.c.bf16 %v699, %v697
        %v726 = vpack.c.bf16 %v702, %v700
        %v727 = vpack.c.bf16 %v703, %v701
        %v728 = vld [vmem:[%s321] sm:$0xff]
        %v729 = vld [vmem:[%s321 + $0x8] sm:$0xff]
        %v730 = vld [vmem:[%s321 + $0x10] sm:$0xff]
        %v731 = vld [vmem:[%s321 + $0x18] sm:$0xff]
        %v732 = vld [vmem:[%s321 + $0x20] sm:$0xff]
        %v733 = vld [vmem:[%s321 + $0x28] sm:$0xff]
        %v734 = vld [vmem:[%s321 + $0x30] sm:$0xff]
        %v735 = vld [vmem:[%s321 + $0x38] sm:$0xff]
        %v736 = vld [vmem:[%s321 + $0x40] sm:$0xff]
        %v737 = vld [vmem:[%s321 + $0x48] sm:$0xff]
        %v738 = vld [vmem:[%s321 + $0x50] sm:$0xff]
        %v739 = vld [vmem:[%s321 + $0x58] sm:$0xff]
        %v740 = vld [vmem:[%s321 + $0x60] sm:$0xff]
        %v741 = vld [vmem:[%s321 + $0x68] sm:$0xff]
        %v742 = vld [vmem:[%s321 + $0x70] sm:$0xff]
        %v743 = vld [vmem:[%s321 + $0x78] sm:$0xff]
        %v744 = vld [vmem:[%s321 + $0x80] sm:$0xff]
        %v745 = vld [vmem:[%s321 + $0x88] sm:$0xff]
        %v746 = vld [vmem:[%s321 + $0x90] sm:$0xff]
        %v747 = vld [vmem:[%s321 + $0x98] sm:$0xff]
        %v748 = vld [vmem:[%s321 + $0xa0] sm:$0xff]
        %v749 = vld [vmem:[%s321 + $0xa8] sm:$0xff]
        %v750 = vld [vmem:[%s321 + $0xb0] sm:$0xff]
        %v751 = vld [vmem:[%s321 + $0xb8] sm:$0xff]
        %v752 = vld [vmem:[%s321 + $0xc0] sm:$0xff]
        %v753 = vld [vmem:[%s321 + $0xc8] sm:$0xff]
        %v754 = vld [vmem:[%s321 + $0xd0] sm:$0xff]
        %v755 = vld [vmem:[%s321 + $0xd8] sm:$0xff]
        %v756 = vld [vmem:[%s321 + $0xe0] sm:$0xff]
        %v757 = vld [vmem:[%s321 + $0xe8] sm:$0xff]
        %v758 = vld [vmem:[%s321 + $0xf0] sm:$0xff]
        %v759 = vld [vmem:[%s321 + $0xf8] sm:$0xff]
        %v760 = vld [vmem:[%s321 + $0x100] sm:$0xff]
        %v761 = vld [vmem:[%s321 + $0x108] sm:$0xff]
        %v762 = vld [vmem:[%s321 + $0x110] sm:$0xff]
        %v763 = vld [vmem:[%s321 + $0x118] sm:$0xff]
        %v764 = vld [vmem:[%s321 + $0x120] sm:$0xff]
        %v765 = vld [vmem:[%s321 + $0x128] sm:$0xff]
        %v766 = vld [vmem:[%s321 + $0x130] sm:$0xff]
        %v767 = vld [vmem:[%s321 + $0x138] sm:$0xff]
        %v768 = vld [vmem:[%s321 + $0x140] sm:$0xff]
        %v769 = vld [vmem:[%s321 + $0x148] sm:$0xff]
        %v770 = vld [vmem:[%s321 + $0x150] sm:$0xff]
        %v771 = vld [vmem:[%s321 + $0x158] sm:$0xff]
        %v772 = vld [vmem:[%s321 + $0x160] sm:$0xff]
        %v773 = vld [vmem:[%s321 + $0x168] sm:$0xff]
        %v774 = vld [vmem:[%s321 + $0x170] sm:$0xff]
        %v775 = vld [vmem:[%s321 + $0x178] sm:$0xff]
        %v776 = vld [vmem:[%s321 + $0x180] sm:$0xff]
        %v777 = vld [vmem:[%s321 + $0x188] sm:$0xff]
        %v778 = vld [vmem:[%s321 + $0x190] sm:$0xff]
        %v779 = vld [vmem:[%s321 + $0x198] sm:$0xff]
        %v780 = vld [vmem:[%s321 + $0x1a0] sm:$0xff]
        %v781 = vld [vmem:[%s321 + $0x1a8] sm:$0xff]
        %v782 = vld [vmem:[%s321 + $0x1b0] sm:$0xff]
        %v783 = vld [vmem:[%s321 + $0x1b8] sm:$0xff]
        %v784 = vld [vmem:[%s321 + $0x1c0] sm:$0xff]
        %v785 = vld [vmem:[%s321 + $0x1c8] sm:$0xff]
        %v786 = vld [vmem:[%s321 + $0x1d0] sm:$0xff]
        %v787 = vld [vmem:[%s321 + $0x1d8] sm:$0xff]
        %v788 = vld [vmem:[%s321 + $0x1e0] sm:$0xff]
        %v789 = vld [vmem:[%s321 + $0x1e8] sm:$0xff]
        %v790 = vld [vmem:[%s321 + $0x1f0] sm:$0xff]
        %v791 = vld [vmem:[%s321 + $0x1f8] sm:$0xff]
        %v792 = vpack.c.bf16 %v730, %v728
        %v793 = vpack.c.bf16 %v731, %v729
        %v794 = vpack.c.bf16 %v734, %v732
        %v795 = vpack.c.bf16 %v735, %v733
        %v796 = vpack.c.bf16 %v738, %v736
        %v797 = vpack.c.bf16 %v739, %v737
        %v798 = vpack.c.bf16 %v742, %v740
        %v799 = vpack.c.bf16 %v743, %v741
        %v800 = vpack.c.bf16 %v746, %v744
        %v801 = vpack.c.bf16 %v747, %v745
        %v802 = vpack.c.bf16 %v750, %v748
        %v803 = vpack.c.bf16 %v751, %v749
        %v804 = vpack.c.bf16 %v754, %v752
        %v805 = vpack.c.bf16 %v755, %v753
        %v806 = vpack.c.bf16 %v758, %v756
        %v807 = vpack.c.bf16 %v759, %v757
        %v808 = vpack.c.bf16 %v762, %v760
        %v809 = vpack.c.bf16 %v763, %v761
        %v810 = vpack.c.bf16 %v766, %v764
        %v811 = vpack.c.bf16 %v767, %v765
        %v812 = vpack.c.bf16 %v770, %v768
        %v813 = vpack.c.bf16 %v771, %v769
        %v814 = vpack.c.bf16 %v774, %v772
        %v815 = vpack.c.bf16 %v775, %v773
        %v816 = vpack.c.bf16 %v778, %v776
        %v817 = vpack.c.bf16 %v779, %v777
        %v818 = vpack.c.bf16 %v782, %v780
        %v819 = vpack.c.bf16 %v783, %v781
        %v820 = vpack.c.bf16 %v786, %v784
        %v821 = vpack.c.bf16 %v787, %v785
        %v822 = vpack.c.bf16 %v790, %v788
        %v823 = vpack.c.bf16 %v791, %v789
        %824 = vmatprep.subr.bf16.mxu0 %v807
        %825 = vmatpush1.bf16.msra.mxu0 %v806
        %826 = vmatprep.subr.bf16.mxu0 %v805
        %827 = vmatpush1.bf16.msra.mxu0 %v804
        %828 = vmatprep.subr.bf16.mxu0 %v803
        %829 = vmatpush1.bf16.msra.mxu0 %v802
        %830 = vmatprep.subr.bf16.mxu0 %v801
        %831 = vmatpush1.bf16.msra.mxu0 %v800
        %832 = vmatprep.subr.bf16.mxu0 %v799
        %833 = vmatpush1.bf16.msra.mxu0 %v798
        %834 = vmatprep.subr.bf16.mxu0 %v797
        %835 = vmatpush1.bf16.msra.mxu0 %v796
        %836 = vmatprep.subr.bf16.mxu0 %v795
        %837 = vmatpush1.bf16.msra.mxu0 %v794
        %838 = vmatprep.subr.bf16.mxu0 %v793
        %839 = vmatpush1.bf16.msra.mxu0 %v792
        %840 = vmatprep.subr.bf16.mxu0 %v823
        %841 = vmatpush2.bf16.msra.mxu0 %v822
        %842 = vmatprep.subr.bf16.mxu0 %v821
        %843 = vmatpush2.bf16.msra.mxu0 %v820
        %844 = vmatprep.subr.bf16.mxu0 %v819
        %845 = vmatpush2.bf16.msra.mxu0 %v818
        %846 = vmatprep.subr.bf16.mxu0 %v817
        %847 = vmatpush2.bf16.msra.mxu0 %v816
        %848 = vmatprep.subr.bf16.mxu0 %v815
        %849 = vmatpush2.bf16.msra.mxu0 %v814
        %850 = vmatprep.subr.bf16.mxu0 %v813
        %851 = vmatpush2.bf16.msra.mxu0 %v812
        %852 = vmatprep.subr.bf16.mxu0 %v811
        %853 = vmatpush2.bf16.msra.mxu0 %v810
        %854 = vmatprep.subr.bf16.mxu0 %v809
        %855 = vmatpush2.bf16.msra.mxu0 %v808
        %856 = vmatprep.mubr.bf16.mxu0 %v721
        %857 = vmatmul.mubr.bf16.gmra.mxu0 %v720
        %v858 = vpop.f32.mrf.mxu0
        %v859 = vadd.f32 0.0, %v858
        %v860 = vpop.f32.mrf.mxu0
        %v861 = vadd.f32 0.0, %v860
        %v862 = vpop.f32.mrf.mxu0
        %v863 = vadd.f32 0.0, %v862
        %v864 = vpop.f32.mrf.mxu0
        %v865 = vadd.f32 0.0, %v864
        %866 = vmatprep.mubr.bf16.mxu0 %v723
        %867 = vmatmul.mubr.bf16.gmra.mxu0 %v722
        %v868 = vpop.f32.mrf.mxu0
        %v869 = vadd.f32 0.0, %v868
        %v870 = vpop.f32.mrf.mxu0
        %v871 = vadd.f32 0.0, %v870
        %v872 = vpop.f32.mrf.mxu0
        %v873 = vadd.f32 0.0, %v872
        %v874 = vpop.f32.mrf.mxu0
        %v875 = vadd.f32 0.0, %v874
        %876 = vmatprep.mubr.bf16.mxu0 %v725
        %877 = vmatmul.mubr.bf16.gmra.mxu0 %v724
        %v878 = vpop.f32.mrf.mxu0
        %v879 = vadd.f32 0.0, %v878
        %v880 = vpop.f32.mrf.mxu0
        %v881 = vadd.f32 0.0, %v880
        %v882 = vpop.f32.mrf.mxu0
        %v883 = vadd.f32 0.0, %v882
        %v884 = vpop.f32.mrf.mxu0
        %v885 = vadd.f32 0.0, %v884
        %886 = vmatprep.mubr.bf16.mxu0 %v727
        %887 = vmatmul.mubr.bf16.gmra.mxu0 %v726
        %v888 = vpop.f32.mrf.mxu0
        %v889 = vadd.f32 0.0, %v888
        %v890 = vpop.f32.mrf.mxu0
        %v891 = vadd.f32 0.0, %v890
        %v892 = vpop.f32.mrf.mxu0
        %v893 = vadd.f32 0.0, %v892
        %v894 = vpop.f32.mrf.mxu0
        %v895 = vadd.f32 0.0, %v894
        %896 = vdwg.mxu0
        %v897 = vadd.f32 %v704, %v859
        %v898 = vadd.f32 %v705, %v861
        %v899 = vadd.f32 %v706, %v863
        %v900 = vadd.f32 %v707, %v865
        %v901 = vadd.f32 %v708, %v869
        %v902 = vadd.f32 %v709, %v871
        %v903 = vadd.f32 %v710, %v873
        %v904 = vadd.f32 %v711, %v875
        %v905 = vadd.f32 %v712, %v879
        %v906 = vadd.f32 %v713, %v881
        %v907 = vadd.f32 %v714, %v883
        %v908 = vadd.f32 %v715, %v885
        %v909 = vadd.f32 %v716, %v889
        %v910 = vadd.f32 %v717, %v891
        %v911 = vadd.f32 %v718, %v893
        %v912 = vadd.f32 %v719, %v895
        %913 = vst [vmem:[#allocation10] sm:$0xff] %v897
        %914 = vst [vmem:[#allocation10 + $0x8] sm:$0xff] %v898
        %915 = vst [vmem:[#allocation10 + $0x10] sm:$0xff] %v899
        %916 = vst [vmem:[#allocation10 + $0x18] sm:$0xff] %v900
        %917 = vst [vmem:[#allocation10 + $0x20] sm:$0xff] %v901
        %918 = vst [vmem:[#allocation10 + $0x28] sm:$0xff] %v902
        %919 = vst [vmem:[#allocation10 + $0x30] sm:$0xff] %v903
        %920 = vst [vmem:[#allocation10 + $0x38] sm:$0xff] %v904
        %921 = vst [vmem:[#allocation10 + $0x40] sm:$0xff] %v905
        %922 = vst [vmem:[#allocation10 + $0x48] sm:$0xff] %v906
        %923 = vst [vmem:[#allocation10 + $0x50] sm:$0xff] %v907
        %924 = vst [vmem:[#allocation10 + $0x58] sm:$0xff] %v908
        %925 = vst [vmem:[#allocation10 + $0x60] sm:$0xff] %v909
        %926 = vst [vmem:[#allocation10 + $0x68] sm:$0xff] %v910
        %927 = vst [vmem:[#allocation10 + $0x70] sm:$0xff] %v911
        %928 = vst [vmem:[#allocation10 + $0x78] sm:$0xff] %v912
        %p929 = scmp.eq.s32.totalorder %s29, 1
        // Predicated region
        $region61: #{tpu_custom_call.1} parent=39 // pred_check
          %p930 = pneg %p929
        $region62: #{tpu_custom_call.1} parent=39 // pred_check_branch
          %932 = sbr.rel (%p930) target = $region64
        $region63: #{tpu_custom_call.1} parent=39 // pred_region
          %v933 = vld [vmem:[#allocation10] sm:$0xff]
          %v934 = vld [vmem:[#allocation10 + $0x8] sm:$0xff]
          %v935 = vld [vmem:[#allocation10 + $0x10] sm:$0xff]
          %v936 = vld [vmem:[#allocation10 + $0x18] sm:$0xff]
          %v937 = vld [vmem:[#allocation10 + $0x20] sm:$0xff]
          %v938 = vld [vmem:[#allocation10 + $0x28] sm:$0xff]
          %v939 = vld [vmem:[#allocation10 + $0x30] sm:$0xff]
          %v940 = vld [vmem:[#allocation10 + $0x38] sm:$0xff]
          %v941 = vld [vmem:[#allocation10 + $0x40] sm:$0xff]
          %v942 = vld [vmem:[#allocation10 + $0x48] sm:$0xff]
          %v943 = vld [vmem:[#allocation10 + $0x50] sm:$0xff]
          %v944 = vld [vmem:[#allocation10 + $0x58] sm:$0xff]
          %v945 = vld [vmem:[#allocation10 + $0x60] sm:$0xff]
          %v946 = vld [vmem:[#allocation10 + $0x68] sm:$0xff]
          %v947 = vld [vmem:[#allocation10 + $0x70] sm:$0xff]
          %v948 = vld [vmem:[#allocation10 + $0x78] sm:$0xff]
          %v949 = vadd.f32 %v933, %v935
          %v950 = vadd.f32 %v949, %v937
          %v951 = vadd.f32 %v950, %v939
          %v952 = vadd.f32 %v951, %v941
          %v953 = vadd.f32 %v952, %v943
          %v954 = vadd.f32 %v953, %v945
          %v955 = vadd.f32 %v954, %v947
          %v956 = vrot.slane %v955, 4
          %v957 = vadd.f32 %v955, %v956
          %v958 = vrot.slane %v957, 2
          %v959 = vadd.f32 %v957, %v958
          %v960 = vrot.slane %v959, 1
          %v961 = vadd.f32 %v959, %v960
          %v962 = vadd.f32 %v934, %v936
          %v963 = vadd.f32 %v962, %v938
          %v964 = vadd.f32 %v963, %v940
          %v965 = vadd.f32 %v964, %v942
          %v966 = vadd.f32 %v965, %v944
          %v967 = vadd.f32 %v966, %v946
          %v968 = vadd.f32 %v967, %v948
          %v969 = vrot.slane %v968, 4
          %v970 = vadd.f32 %v968, %v969
          %v971 = vrot.slane %v970, 2
          %v972 = vadd.f32 %v970, %v971
          %v973 = vrot.slane %v972, 1
          %v974 = vadd.f32 %v972, %v973
          %v975 = vmul.f32 %v961, 0.015625
          %v976 = vmul.f32 %v974, 0.015625
          %v977 = vsub.f32 %v933, %v975
          %v978 = vsub.f32 %v934, %v976
          %v979 = vsub.f32 %v935, %v975
          %v980 = vsub.f32 %v936, %v976
          %v981 = vsub.f32 %v937, %v975
          %v982 = vsub.f32 %v938, %v976
          %v983 = vsub.f32 %v939, %v975
          %v984 = vsub.f32 %v940, %v976
          %v985 = vsub.f32 %v941, %v975
          %v986 = vsub.f32 %v942, %v976
          %v987 = vsub.f32 %v943, %v975
          %v988 = vsub.f32 %v944, %v976
          %v989 = vsub.f32 %v945, %v975
          %v990 = vsub.f32 %v946, %v976
          %v991 = vsub.f32 %v947, %v975
          %v992 = vsub.f32 %v948, %v976
          %v993 = vmul.f32 %v977, %v977
          %v994 = vmul.f32 %v978, %v978
          %v995 = vmul.f32 %v979, %v979
          %v996 = vmul.f32 %v980, %v980
          %v997 = vmul.f32 %v981, %v981
          %v998 = vmul.f32 %v982, %v982
          %v999 = vmul.f32 %v983, %v983
          %v1000 = vmul.f32 %v984, %v984
          %v1001 = vmul.f32 %v985, %v985
          %v1002 = vmul.f32 %v986, %v986
          %v1003 = vmul.f32 %v987, %v987
          %v1004 = vmul.f32 %v988, %v988
          %v1005 = vmul.f32 %v989, %v989
          %v1006 = vmul.f32 %v990, %v990
          %v1007 = vmul.f32 %v991, %v991
          %v1008 = vmul.f32 %v992, %v992
          %v1009 = vadd.f32 %v993, %v995
          %v1010 = vadd.f32 %v1009, %v997
          %v1011 = vadd.f32 %v1010, %v999
          %v1012 = vadd.f32 %v1011, %v1001
          %v1013 = vadd.f32 %v1012, %v1003
          %v1014 = vadd.f32 %v1013, %v1005
          %v1015 = vadd.f32 %v1014, %v1007
          %v1016 = vrot.slane %v1015, 4
          %v1017 = vadd.f32 %v1015, %v1016
          %v1018 = vrot.slane %v1017, 2
          %v1019 = vadd.f32 %v1017, %v1018
          %v1020 = vrot.slane %v1019, 1
          %v1021 = vadd.f32 %v1019, %v1020
          %v1022 = vadd.f32 %v994, %v996
          %v1023 = vadd.f32 %v1022, %v998
          %v1024 = vadd.f32 %v1023, %v1000
          %v1025 = vadd.f32 %v1024, %v1002
          %v1026 = vadd.f32 %v1025, %v1004
          %v1027 = vadd.f32 %v1026, %v1006
          %v1028 = vadd.f32 %v1027, %v1008
          %v1029 = vrot.slane %v1028, 4
          %v1030 = vadd.f32 %v1028, %v1029
          %v1031 = vrot.slane %v1030, 2
          %v1032 = vadd.f32 %v1030, %v1031
          %v1033 = vrot.slane %v1032, 1
          %v1034 = vadd.f32 %v1032, %v1033
          %v1035 = vmul.f32 %v1021, 0.015625
          %v1036 = vmul.f32 %v1034, 0.015625
          %v1037 = vadd.f32 %v1035, 1e-05
          %v1038 = vadd.f32 %v1036, 1e-05
          %v1039 = vrsqrt.pop %v1037
          %v1040 = vrsqrt.pop %v1038
          %v1041 = vmul.f32 %v977, %v1039
          %v1042 = vmul.f32 %v978, %v1040
          %v1043 = vmul.f32 %v979, %v1039
          %v1044 = vmul.f32 %v980, %v1040
          %v1045 = vmul.f32 %v981, %v1039
          %v1046 = vmul.f32 %v982, %v1040
          %v1047 = vmul.f32 %v983, %v1039
          %v1048 = vmul.f32 %v984, %v1040
          %v1049 = vmul.f32 %v985, %v1039
          %v1050 = vmul.f32 %v986, %v1040
          %v1051 = vmul.f32 %v987, %v1039
          %v1052 = vmul.f32 %v988, %v1040
          %v1053 = vmul.f32 %v989, %v1039
          %v1054 = vmul.f32 %v990, %v1040
          %v1055 = vmul.f32 %v991, %v1039
          %v1056 = vmul.f32 %v992, %v1040
          %1057 = vst [vmem:[#allocation10] sm:$0xff] %v1041
          %1058 = vst [vmem:[#allocation10 + $0x8] sm:$0xff] %v1042
          %1059 = vst [vmem:[#allocation10 + $0x10] sm:$0xff] %v1043
          %1060 = vst [vmem:[#allocation10 + $0x18] sm:$0xff] %v1044
          %1061 = vst [vmem:[#allocation10 + $0x20] sm:$0xff] %v1045
          %1062 = vst [vmem:[#allocation10 + $0x28] sm:$0xff] %v1046
          %1063 = vst [vmem:[#allocation10 + $0x30] sm:$0xff] %v1047
          %1064 = vst [vmem:[#allocation10 + $0x38] sm:$0xff] %v1048
          %1065 = vst [vmem:[#allocation10 + $0x40] sm:$0xff] %v1049
          %1066 = vst [vmem:[#allocation10 + $0x48] sm:$0xff] %v1050
          %1067 = vst [vmem:[#allocation10 + $0x50] sm:$0xff] %v1051
          %1068 = vst [vmem:[#allocation10 + $0x58] sm:$0xff] %v1052
          %1069 = vst [vmem:[#allocation10 + $0x60] sm:$0xff] %v1053
          %1070 = vst [vmem:[#allocation10 + $0x68] sm:$0xff] %v1054
          %1071 = vst [vmem:[#allocation10 + $0x70] sm:$0xff] %v1055
          %1072 = vst [vmem:[#allocation10 + $0x78] sm:$0xff] %v1056
        $region64: #{tpu_custom_call.1} parent=39 // pred_fallthru
          _
        // Predicated region
        $region65: #{tpu_custom_call.1} parent=39 // pred_check
          %p1073 = pneg %p181
        $region66: #{tpu_custom_call.1} parent=39 // pred_check_branch
          %1075 = sbr.rel (%p1073) target = $region68
        $region67: #{tpu_custom_call.1} parent=39 // pred_region
          %s1076 = smul.u32 2, %s28
          %s1078 = ssub.s32 2048, 2048
          %1079 = vsyncadd [#allocation4], %s1078
          %s1080 = smul.addr %s1076, 128
          %s1081 = scalar_lea.hbm %s5, %s1080
          %s1082 = sshll.u32 [#allocation10], 4
          %s1083 = int_to_ptr.vmem [resolvable:$true] %s1082
          %1088 = dma.vmem_to_hbm [thread:$0]  %s1083, 2048, %s1081, [#allocation4], 256, 256, 16
        $region68: #{tpu_custom_call.1} parent=39 // pred_fallthru
          _
        // Predicated region
        $region69: #{tpu_custom_call.1} parent=39 // pred_check
          %p1089 = pneg %p181
        $region70: #{tpu_custom_call.1} parent=39 // pred_check_branch
          %1091 = sbr.rel (%p1089) target = $region72
        $region71: #{tpu_custom_call.1} parent=39 // pred_region
          %1092 = dma.done [#allocation4], 2048
        $region72: #{tpu_custom_call.1} parent=39 // pred_fallthru
          _
      $region40: #{tpu_custom_call.1} parent=5 // pred_fallthru
        _
      %p1093 = scmp.le.s32.totalorder 2, %s19
      // Predicated region
      $region73: #{tpu_custom_call.1} parent=5 // pred_check
        %p1094 = pneg %p1093
      $region74: #{tpu_custom_call.1} parent=5 // pred_check_branch
        %1096 = sbr.rel (%p1094) target = $region76
      $region75: #{tpu_custom_call.1} parent=5 // pred_region
        %s1097 = ssub.s32 %s19, 2
      $region76: #{tpu_custom_call.1} parent=5 // pred_fallthru
        _
    $region6: #{tpu_custom_call.1} parent=1 // loop_footer
      %s23 = sadd.s32 1, %s19
    $region7: #{tpu_custom_call.1} parent=1 // loop_footer_branch
      %18 = sbr.rel target = $region3
    $region8: #{tpu_custom_call.1} parent=1 // loop_exit
      _
    %1098 = vsyncpa [#allocation3], 1
    %s1099 = scalar_lea.sflag [#allocation3], 1
    %1100 = vsyncpa %s1099, 1
    %1101 = vsyncpa [#allocation6], 1
    %s1102 = scalar_lea.sflag [#allocation6], 1
    %1103 = vsyncpa %s1102, 1
    %1104 = vsyncpa [#allocation9], 1
    %s1105 = scalar_lea.sflag [#allocation9], 1
    %1106 = vsyncpa %s1105, 1
    %1107 = vsyncpa [#allocation4], 1
    %s1108 = scalar_lea.sflag [#allocation4], 1
    %1109 = vsyncpa %s1108, 1

</llo_original>
